<compile_context>
chip_gen: v6e
topology: v6e:2x2x1
jax: 0.10.0
libtpu: 0.0.40
codegen_flags: <defaults>
</compile_context>

<pallas_src>
import jax
import jax.numpy as jnp
from jax.experimental import pallas as pl
from jax.experimental.pallas import tpu as pltpu

# Deterministic "parameters" (the module has no learned weights; __init__ forces
# norm_bias = 0.0 regardless of the constructor argument).
NORM_BIAS = 0.0
GAIN = 1.0
SHIFT = 0.0

_TARGET_BLOCK_BYTES = 8 * 1024 * 1024   # target HBM->VMEM input block size


# --------------------------------------------------------------------------- #
# Kernels
# --------------------------------------------------------------------------- #
def _divnorm_kernel(x_ref, o_ref):
    """Full-D row-tile kernel: (TM, D) in VMEM, D on the lane axis."""
    x = x_ref[...].astype(jnp.float32)
    mean = jnp.mean(x, axis=1, keepdims=True)
    xc = x - mean
    sq_sum = jnp.sum(xc * xc, axis=1, keepdims=True)
    if NORM_BIAS != 0.0:                       # compile-time constant fold
        sq_sum = sq_sum + NORM_BIAS
    out = xc * jax.lax.rsqrt(sq_sum)           # single EUP op (no sqrt+div)
    if GAIN != 1.0:
        out = GAIN * out
    if SHIFT != 0.0:
        out = out + SHIFT
    o_ref[...] = out.astype(o_ref.dtype)


def _make_dchunk_kernel(d_total, tile_d):
    """Large-D fallback: grid = (rows, 2 phases, D chunks).

    Phase 0 accumulates per-row sum / sum-of-squares over D chunks into VMEM
    scratch; phase 1 re-reads the chunks and writes (x - mean) * rsqrt(ss).
    Output index_map keeps block (i, 0) during phase 0 so only phase-1 data is
    ever flushed to HBM (no extra output traffic).
    """
    inv_d = 1.0 / float(d_total)

    def kernel(x_ref, o_ref, sum_ref, sq_ref):
        p = pl.program_id(1)
        k = pl.program_id(2)

        @pl.when(jnp.logical_and(p == 0, k == 0))
        def _():
            sum_ref[...] = jnp.zeros_like(sum_ref)
            sq_ref[...] = jnp.zeros_like(sq_ref)

        @pl.when(p == 0)
        def _():
            x = x_ref[...].astype(jnp.float32)
            # Mask out-of-bounds columns of a ragged last D chunk.
            col = k * tile_d + jax.lax.broadcasted_iota(jnp.int32, x.shape, 1)
            x = jnp.where(col < d_total, x, 0.0)
            sum_ref[...] += jnp.sum(x, axis=1, keepdims=True)
            sq_ref[...] += jnp.sum(x * x, axis=1, keepdims=True)

        @pl.when(jnp.logical_and(p == 1, k == 0))
        def _():
            s = sum_ref[...]
            mean = s * inv_d
            # sum((x - mean)^2) = sumsq - sum * mean  (f32 accumulation;
            # clamp to guard against tiny negative cancellation residue).
            css = jnp.maximum(sq_ref[...] - s * mean, 0.0)
            if NORM_BIAS != 0.0:
                css = css + NORM_BIAS
            sum_ref[...] = mean                    # reuse scratch: mean
            sq_ref[...] = jax.lax.rsqrt(css)       # reuse scratch: 1/norm

        @pl.when(p == 1)
        def _():
            x = x_ref[...].astype(jnp.float32)
            out = (x - sum_ref[...]) * sq_ref[...]
            if GAIN != 1.0:
                out = GAIN * out
            if SHIFT != 0.0:
                out = out + SHIFT
            o_ref[...] = out.astype(o_ref.dtype)

    return kernel


# --------------------------------------------------------------------------- #
# Tiling heuristics
# --------------------------------------------------------------------------- #
def _min_rows_for_dtype(dtype):
    itemsize = jnp.dtype(dtype).itemsize
    return {4: 8, 2: 16, 1: 32}.get(itemsize, 8)


def _round_down(v, m):
    return max(m, (v // m) * m)


def _device_info():
    """(physical VMEM bytes, TensorCores per chip) with safe fallbacks."""
    vmem_bytes = 64 * 1024 * 1024          # conservative default (v7x-sized)
    num_cores = 1
    try:
        info = pltpu.get_tpu_info()
        vmem_bytes = int(getattr(info, "vmem_capacity_bytes", vmem_bytes))
    except Exception:
        pass
    try:
        dev = jax.devices()[0]
        nc = getattr(dev, "num_cores", None)
        if nc:
            num_cores = max(1, int(nc))
        else:
            kind = str(getattr(dev, "device_kind", "")).lower()
            if any(tag in kind for tag in ("v7", "v4", "v5p")):
                num_cores = 2              # multi-TensorCore generations
    except Exception:
        pass
    return vmem_bytes, num_cores


def _vmem_budget_and_limit(vmem_bytes):
    # Budget covers 2x double-buffered (in + out) blocks plus in-kernel f32
    # temps; the scoped limit leaves headroom above it for compiler scratch.
    budget = min(48 * 1024 * 1024, vmem_bytes // 2)     # 128MiB->48, 64MiB->32
    limit = min(64 * 1024 * 1024, (vmem_bytes * 3) // 4)
    limit = max(limit, budget + 8 * 1024 * 1024)
    return budget, limit


def _pick_tile_rows(n, d, dtype, budget, num_cores, tile_rows):
    itemsize = jnp.dtype(dtype).itemsize
    min_rows = _min_rows_for_dtype(dtype)
    # Per-element VMEM accounting: double-buffered in + out (2x each) plus the
    # f32 temporaries that actually live in the kernel (1 for f32 input, ~2
    # for sub-32-bit inputs because of the up-cast).
    temp_f32 = 1 if itemsize == 4 else 2
    per_elem = 4 * itemsize + 4 * temp_f32

    if tile_rows is not None:
        rows = _round_down(int(tile_rows), min_rows)
    else:
        rows = max(min_rows, _TARGET_BLOCK_BYTES // max(1, d * itemsize))
        rows = min(rows, max(min_rows, budget // max(1, d * per_elem)))
        rows = _round_down(rows, min_rows)
    # Never exceed the sublane-rounded row count of the input.
    rows = min(rows, pl.cdiv(n, min_rows) * min_rows)
    # Multi-TensorCore chips: aim for >= 2 pipelined grid steps per core so DMA
    # overlaps compute on each core.  Single-core chips keep one big block.
    if tile_rows is None and num_cores > 1 and n >= 2 * num_cores * min_rows:
        rows = min(rows, _round_down(pl.cdiv(n, 2 * num_cores), min_rows))
    return rows, per_elem, min_rows


# --------------------------------------------------------------------------- #
# Wrapper
# --------------------------------------------------------------------------- #
def div_norm(x, *, tile_rows=None, tile_d=None, force_d_chunked=False):
    """DivNorm forward. x: (N, D). Returns same shape/dtype as x."""
    assert x.ndim == 2, "DivNorm reduces over axis=1 of a 2D (N, D) input"
    n, d = x.shape
    dtype = x.dtype
    itemsize = jnp.dtype(dtype).itemsize

    vmem_bytes, num_cores = _device_info()
    budget, vmem_limit = _vmem_budget_and_limit(vmem_bytes)
    rows, per_elem, min_rows = _pick_tile_rows(n, d, dtype, budget, num_cores,
                                               tile_rows)

    full_d_fits = (min_rows * d * per_elem) <= budget
    if full_d_fits and not force_d_chunked:
        # -------- fast path: full-D row tiles, single parallel grid axis -----
        grid_rows = pl.cdiv(n, rows)       # no pad / no slice: last block's OOB
        return pl.pallas_call(             # rows are masked on writeback
            _divnorm_kernel,
            out_shape=jax.ShapeDtypeStruct((n, d), dtype),
            grid_spec=pltpu.PrefetchScalarGridSpec(
                num_scalar_prefetch=0,
                grid=(grid_rows,),
                in_specs=[pl.BlockSpec((rows, d), lambda i: (i, 0))],
                out_specs=pl.BlockSpec((rows, d), lambda i: (i, 0)),
            ),
            compiler_params=pltpu.CompilerParams(
                dimension_semantics=("parallel",),
                vmem_limit_bytes=vmem_limit,
            ),
        )(x)

    # -------- large-D fallback: D-chunked, two-sweep (accumulate, write) -----
    if tile_rows is None:
        rows = max(min_rows, min(rows, 8 * min_rows))
    if tile_d is None:
        td = budget // max(1, rows * per_elem)
        td = max(128, (td // 128) * 128)
        td = min(td, max(128, (_TARGET_BLOCK_BYTES
                               // max(1, rows * itemsize) // 128) * 128))
    else:
        td = max(128, (int(tile_d) // 128) * 128)
    td = min(td, pl.cdiv(d, 128) * 128)

    grid_rows = pl.cdiv(n, rows)
    grid_d = pl.cdiv(d, td)
    return pl.pallas_call(
        _make_dchunk_kernel(d, td),
        out_shape=jax.ShapeDtypeStruct((n, d), dtype),
        grid_spec=pltpu.PrefetchScalarGridSpec(
            num_scalar_prefetch=0,
            grid=(grid_rows, 2, grid_d),
            in_specs=[pl.BlockSpec((rows, td), lambda i, p, k: (i, k))],
            # Phase 0 pins the output block at (i, 0) so nothing is flushed
            # until phase 1 has written real data into it.
            out_specs=pl.BlockSpec((rows, td), lambda i, p, k: (i, p * k)),
            scratch_shapes=[pltpu.VMEM((rows, 1), jnp.float32),   # row sums
                            pltpu.VMEM((rows, 1), jnp.float32)],  # row sumsq
        ),
        compiler_params=pltpu.CompilerParams(
            dimension_semantics=("parallel", "arbitrary", "arbitrary"),
            vmem_limit_bytes=vmem_limit,
        ),
    )(x)


def div_norm_ref(x):
    xf = x.astype(jnp.float32)
    xc = xf - jnp.mean(xf, axis=1, keepdims=True)
    norm = jnp.sqrt(NORM_BIAS + jnp.sum(xc * xc, axis=1, keepdims=True))
    return (GAIN * xc / norm + SHIFT).astype(x.dtype)


# --------------------------------------------------------------------------- #
if __name__ == "__main__":
    key = jax.random.PRNGKey(0)
    k1, k2, k3, k4 = jax.random.split(key, 4)

    # Case 1: ragged row count (10 % 8 != 0) -> last block has masked OOB rows,
    # no host-side pad/slice.
    x1 = jax.random.normal(k1, (10, 128), dtype=jnp.float32)
    o1 = jax.block_until_ready(div_norm(x1))
    assert o1.shape == x1.shape and o1.dtype == x1.dtype
    assert jnp.allclose(o1, div_norm_ref(x1), atol=1e-5, rtol=1e-5), "case 1"

    # Case 2: multi-step pipelined row grid (forced small tiles).
    x2 = jax.random.normal(k2, (40, 256), dtype=jnp.float32)
    o2 = jax.block_until_ready(div_norm(x2, tile_rows=8))
    assert jnp.allclose(o2, div_norm_ref(x2), atol=1e-5, rtol=1e-5), "case 2"

    # Case 3: feature dim < 128 (full-extent lane block; accepted inefficiency).
    x3 = jax.random.normal(k3, (16, 96), dtype=jnp.float32)
    o3 = jax.block_until_ready(div_norm(x3))
    assert jnp.allclose(o3, div_norm_ref(x3), atol=1e-5, rtol=1e-5), "case 3"

    # Case 4: force the large-D (D-chunked, two-sweep) fallback on a small
    # shape; ragged N and a ragged last D chunk exercise both masks.
    x4 = jax.random.normal(k4, (20, 400), dtype=jnp.float32)
    o4 = jax.block_until_ready(
        div_norm(x4, tile_rows=8, tile_d=128, force_d_chunked=True))
    assert jnp.allclose(o4, div_norm_ref(x4), atol=1e-5, rtol=1e-4), "case 4"

    # Case 5: bf16 input (reductions in f32, output cast back to bf16).
    x5 = jax.random.normal(k1, (48, 256), dtype=jnp.float32).astype(jnp.bfloat16)
    o5 = jax.block_until_ready(div_norm(x5))
    assert o5.dtype == jnp.bfloat16
    assert jnp.allclose(o5.astype(jnp.float32),
                        div_norm_ref(x5).astype(jnp.float32),
                        atol=1e-2, rtol=1e-2), "case 5"

    print("KERNEL_OK")
</pallas_src>

<mosaic_0001>
module attributes {stable_mosaic.version = 11 : i64} {
  func.func @_divnorm_kernel(%arg0: i32, %arg1: memref<16x128xf32, #tpu.memory_space<vmem>>, %arg2: memref<16x128xf32, #tpu.memory_space<vmem>>) attributes {dimension_semantics = [#tpu.dimension_semantics<parallel>], iteration_bounds = array<i64: 1>, scalar_prefetch = 0 : i64, scratch_operands = 0 : i64, tpu.core_type = #tpu.core_type<tc>, window_params = [{transform_indices = @transform_0, window_bounds = array<i64: 16, 128>}, {transform_indices = @transform_1, window_bounds = array<i64: 16, 128>}]} {
    %c0 = arith.constant 0 : index
    %c0_0 = arith.constant 0 : index
    %0 = vector.load %arg1[%c0, %c0_0] : memref<16x128xf32, #tpu.memory_space<vmem>>, vector<16x128xf32>
    %cst = arith.constant dense<0.000000e+00> : vector<16xf32>
    %1 = vector.multi_reduction <add>, %0, %cst [1] : vector<16x128xf32> to vector<16xf32>
    %2 = vector.shape_cast %1 : vector<16xf32> to vector<16x1xf32>
    %cst_1 = arith.constant 1.280000e+02 : f32
    %3 = vector.broadcast %cst_1 : f32 to vector<16x1xf32>
    %4 = arith.divf %2, %3 : vector<16x1xf32>
    %5 = vector.broadcast %4 : vector<16x1xf32> to vector<16x128xf32>
    %6 = arith.subf %0, %5 : vector<16x128xf32>
    %7 = arith.mulf %6, %6 : vector<16x128xf32>
    %cst_2 = arith.constant dense<0.000000e+00> : vector<16xf32>
    %8 = vector.multi_reduction <add>, %7, %cst_2 [1] : vector<16x128xf32> to vector<16xf32>
    %9 = vector.shape_cast %8 : vector<16xf32> to vector<16x1xf32>
    %10 = math.rsqrt %9 : vector<16x1xf32>
    %11 = vector.broadcast %10 : vector<16x1xf32> to vector<16x128xf32>
    %12 = arith.mulf %6, %11 : vector<16x128xf32>
    %c0_3 = arith.constant 0 : index
    %c0_4 = arith.constant 0 : index
    %13 = vector.load %arg2[%c0_3, %c0_4] : memref<16x128xf32, #tpu.memory_space<vmem>>, vector<16x128xf32>
    tpu.vector_store %arg2[%c0_3, %c0_4], %12 {strides = array<i32>} : memref<16x128xf32, #tpu.memory_space<vmem>>, vector<16x128xf32>,
    return
  }
  func.func @transform_0(%arg0: i32) -> (i32, i32) {
    %c0_i32 = arith.constant 0 : i32
    %c0_i32_0 = arith.constant 0 : i32
    return %arg0, %c0_i32 : i32, i32
  }
  func.func @transform_1(%arg0: i32) -> (i32, i32) {
    %c0_i32 = arith.constant 0 : i32
    %c0_i32_0 = arith.constant 0 : i32
    return %arg0, %c0_i32 : i32, i32
  }
}

</mosaic_0001>

<llo_original>
// kernel: tpu_custom_call.1
$region0: #{tpu_custom_call.1}
  #allocation0 [shape = 'u32[]', space=smem, size = 0x4, offset = 0x4, fixed_abs, tag = 'smem constant byte address 0x4 - core index']
  #allocation1 [shape = 'u32[144,128]{1,0:T(1,128)}', space=vmem, size = 0x12000, scoped, tag = 'internal scratch']
  %s0 = inlined_call_operand.hbm [shape: f32[10,128], index: 0, kind: input, shape index: {}]
  %s1 = inlined_call_operand.hbm [shape: f32[10,128], index: 1, kind: output, shape index: {}]
  %s2 = sld [smem:[#allocation0]]
  $region18: #{tpu_custom_call.1} parent=0
    _
  %s4 = ssub.s32 1, %s2
  %s5 = scalar_select 0, %s4, %s2
  $region1: #{tpu_custom_call.1} parent=0
    #allocation2 [shape = 'u8[8192]{0}', space=vmem, size = 0x2000, scoped, tag = 'input window, operand 0, single buffered']
    #allocation3 [shape = 's32[1]{0}', space=sflag, size = 0x4, scoped, tag = 'scoped memory for tpu_custom_call.1']
    #allocation4 [shape = 's32[1]{0}', space=sflag, size = 0x4, scoped, tag = 'scoped memory for tpu_custom_call.1']
    #allocation5 [shape = 'u8[8192]{0}', space=vmem, size = 0x2000, scoped, tag = 'output window, operand 0, single buffered']
    %6 = vsyncpa [#allocation3], 0
    %7 = vsyncpa [#allocation4], 0
    // Predicated region
    $region2: #{tpu_custom_call.1} parent=1 // pred_check
      _
    $region3: #{tpu_custom_call.1} parent=1 // pred_check_branch
      %9 = sbr.rel (0) target = $region5
    $region4: #{tpu_custom_call.1} parent=1 // pred_region
      %s11 = ssub.s32 256, 256
      %12 = vsyncadd [#allocation3], %s11
      %s13 = sshll.u32 [#allocation2], 4
      %s14 = int_to_ptr.vmem [resolvable:$true] %s13
      %19 = dma.hbm_to_vmem [thread:$0]  %s0, 256, %s14, [#allocation3], 128, 128, 8
    $region5: #{tpu_custom_call.1} parent=1 // pred_fallthru
      _
    // Predicated region
    $region6: #{tpu_custom_call.1} parent=1 // pred_check
      _
    $region7: #{tpu_custom_call.1} parent=1 // pred_check_branch
      %21 = sbr.rel (0) target = $region9
    $region8: #{tpu_custom_call.1} parent=1 // pred_region
      %22 = dma.done [#allocation3], 256
    $region9: #{tpu_custom_call.1} parent=1 // pred_fallthru
      _
    %v23 = vld [vmem:[#allocation2] sm:$0xff]
    %v24 = vld [vmem:[#allocation2 + $0x8] sm:$0xff]
    %25 = vadd.xlane.f32.xlu0 %v23
    %v26 = vpop.xlane.xlu0 %25
    %27 = vadd.xlane.f32.xlu0 %v24
    %v28 = vpop.xlane.xlu0 %27
    %v29 = vrcp.pop 128.0
    %v30 = vmul.f32 %v26, %v29
    %v31 = vmul.f32 %v28, %v29
    %v32 = vsub.f32 %v23, %v30
    %v33 = vsub.f32 %v24, %v31
    %v34 = vmul.f32 %v32, %v32
    %v35 = vmul.f32 %v33, %v33
    %36 = vadd.xlane.f32.xlu0 %v34
    %v37 = vpop.xlane.xlu0 %36
    %38 = vadd.xlane.f32.xlu0 %v35
    %v39 = vpop.xlane.xlu0 %38
    %v40 = vrsqrt.pop %v37
    %v41 = vrsqrt.pop %v39
    %v42 = vmul.f32 %v32, %v40
    %v43 = vmul.f32 %v33, %v41
    %44 = vst [vmem:[#allocation5] sm:$0xff] %v42
    %45 = vst [vmem:[#allocation5 + $0x8] sm:$0xff] %v43
    // Predicated region
    $region10: #{tpu_custom_call.1} parent=1 // pred_check
      _
    $region11: #{tpu_custom_call.1} parent=1 // pred_check_branch
      %47 = sbr.rel (0) target = $region13
    $region12: #{tpu_custom_call.1} parent=1 // pred_region
      %s49 = ssub.s32 256, 256
      %50 = vsyncadd [#allocation4], %s49
      %s51 = sshll.u32 [#allocation5], 4
      %s52 = int_to_ptr.vmem [resolvable:$true] %s51
      %57 = dma.vmem_to_hbm [thread:$0]  %s52, 256, %s1, [#allocation4], 128, 128, 8
    $region13: #{tpu_custom_call.1} parent=1 // pred_fallthru
      _
    // Predicated region
    $region14: #{tpu_custom_call.1} parent=1 // pred_check
      _
    $region15: #{tpu_custom_call.1} parent=1 // pred_check_branch
      %59 = sbr.rel (0) target = $region17
    $region16: #{tpu_custom_call.1} parent=1 // pred_region
      %60 = dma.done [#allocation4], 256
    $region17: #{tpu_custom_call.1} parent=1 // pred_fallthru
      _
    %61 = vsyncpa [#allocation3], 1
    %62 = vsyncpa [#allocation4], 1

</llo_original>
